<compile_context>
chip_gen: v7x
topology: tpu7x:2x2x1
jax: 0.10.0
libtpu: 0.0.40
codegen_flags: <defaults>
</compile_context>

<pallas_src>
import functools

import jax
import jax.numpy as jnp
from jax import lax
from jax.experimental import pallas as pl
from jax.experimental.pallas import tpu as pltpu


# ----------------------------- kernels ---------------------------------------

def _gn_channels_last_kernel(x_ref, w_ref, b_ref, p_ref, o_ref, stats_ref, *, eps):
    """Channels-last block.

    x_ref, o_ref : (Nb, L, C)   activations (native dtype), L = flattened spatial
    w_ref, b_ref : (1, C)       per-channel affine (f32)
    p_ref        : (C, C)       block-diagonal group-averaging matrix (f32)
    stats_ref    : (2*Nb, C)    f32 scratch: rows 2n / 2n+1 = sum(x), sum(x*x) of sample n
    """
    nb = x_ref.shape[0]

    # Pass 1: per-sample, per-channel sum and sum-of-squares (f32 accumulation).
    for n in range(nb):
        xn = x_ref[n].astype(jnp.float32)                                # (L, C)
        stats_ref[2 * n: 2 * n + 1, :] = jnp.sum(xn, axis=0, keepdims=True)
        stats_ref[2 * n + 1: 2 * n + 2, :] = jnp.sum(xn * xn, axis=0, keepdims=True)

    # Fold per-channel sums -> per-group means broadcast back to channels.
    # Single (2*Nb, C) x (C, C) MXU matmul, full f32 precision.
    folded = jnp.dot(stats_ref[...], p_ref[...],
                     preferred_element_type=jnp.float32,
                     precision=lax.Precision.HIGHEST)                    # (2*Nb, C)

    # Pass 2: normalize + per-channel affine (re-reads x; keeps vreg pressure low).
    for n in range(nb):
        mean = folded[2 * n: 2 * n + 1, :]                               # (1, C)
        ex2 = folded[2 * n + 1: 2 * n + 2, :]                            # (1, C)
        var = jnp.maximum(ex2 - mean * mean, 0.0)
        inv = lax.rsqrt(var + eps)                                       # EUP
        scale = inv * w_ref[...]                                         # (1, C)
        shift = b_ref[...] - mean * scale                                # (1, C)
        xn = x_ref[n].astype(jnp.float32)                                # (L, C)
        o_ref[n] = (xn * scale + shift).astype(o_ref.dtype)


def _gn_channels_first_kernel(x_ref, w_ref, b_ref, p_ref, o_ref, stats_ref, *, eps):
    """Channels-first block (no wrapper transposes).

    x_ref, o_ref : (Nb, C, L)   activations (native dtype), channels on sublanes
    w_ref, b_ref : (C, 1)       per-channel affine (f32)
    p_ref        : (C, C)       block-diagonal group-averaging matrix (f32)
    stats_ref    : (C, 2*Nb)    f32 scratch: cols 2n / 2n+1 = sum(x), sum(x*x) of sample n
    """
    nb = x_ref.shape[0]

    for n in range(nb):
        xn = x_ref[n].astype(jnp.float32)                                # (C, L)
        stats_ref[:, 2 * n: 2 * n + 1] = jnp.sum(xn, axis=1, keepdims=True)
        stats_ref[:, 2 * n + 1: 2 * n + 2] = jnp.sum(xn * xn, axis=1, keepdims=True)

    folded = jnp.dot(p_ref[...], stats_ref[...],
                     preferred_element_type=jnp.float32,
                     precision=lax.Precision.HIGHEST)                    # (C, 2*Nb)

    for n in range(nb):
        mean = folded[:, 2 * n: 2 * n + 1]                               # (C, 1)
        ex2 = folded[:, 2 * n + 1: 2 * n + 2]                            # (C, 1)
        var = jnp.maximum(ex2 - mean * mean, 0.0)
        inv = lax.rsqrt(var + eps)                                       # EUP
        scale = inv * w_ref[...]                                         # (C, 1)
        shift = b_ref[...] - mean * scale                                # (C, 1)
        xn = x_ref[n].astype(jnp.float32)                                # (C, L)
        o_ref[n] = (xn * scale + shift).astype(o_ref.dtype)


# ----------------------------- helpers ----------------------------------------

def _group_avg_matrix(C, G, denom):
    """P[i, j] = 1/denom if channels i, j are in the same group else 0."""
    cg = C // G
    ch = jnp.arange(C)
    same = (ch[:, None] // cg) == (ch[None, :] // cg)
    return same.astype(jnp.float32) / float(denom)


def _pick_block_batch(N, per_sample_bytes, *, target_tile_bytes=1 << 20,
                      max_nb=8, vmem_budget_bytes=16 << 20):
    """Samples per grid step: ~1 MiB tiles, VMEM-safe, >= 2 grid steps when possible."""
    nb = max(1, min(max_nb, N, target_tile_bytes // max(per_sample_bytes, 1)))
    # Double-buffered input + output tiles must fit the VMEM budget (v7x: 64 MiB phys).
    while nb > 1 and 4 * nb * per_sample_bytes > vmem_budget_bytes:
        nb -= 1
    # Keep at least two grid steps so BlockSpec pipelining / megacore have work.
    if N >= 2:
        nb = min(nb, max(1, N // 2))
    nb = max(nb, 1)
    while N % nb:
        nb -= 1
    return nb


def _vmem_limit_bytes(tile_bytes, const_bytes):
    need = 4 * tile_bytes + const_bytes + (2 << 20)        # 2x(in)+2x(out) + consts + slack
    return int(min(max(need, 16 << 20), 96 << 20))


def _cost_estimate(n_elems, io_bytes_per_elem, n_channels_total, const_bytes):
    return pl.CostEstimate(
        flops=int(8 * n_elems),
        transcendentals=int(n_channels_total),
        bytes_accessed=int(2 * n_elems * io_bytes_per_elem + const_bytes),
    )


# ----------------------------- drivers -----------------------------------------

def _run_channels_last(x3, weight, bias, num_groups, eps):
    """x3: (N, L, C) native dtype; per-(n, group) stats over (L, C//G)."""
    N, L, C = x3.shape
    G = int(num_groups)
    assert C % G == 0, (C, G)
    cg = C // G
    item = x3.dtype.itemsize
    nb = _pick_block_batch(N, L * C * item)

    p = _group_avg_matrix(C, G, L * cg)
    w2 = weight.reshape(1, C).astype(jnp.float32)
    b2 = bias.reshape(1, C).astype(jnp.float32)

    tile_bytes = nb * L * C * item
    const_bytes = C * C * 4 + 2 * C * 4 + 2 * nb * C * 4
    kern = functools.partial(_gn_channels_last_kernel, eps=float(eps))

    return pl.pallas_call(
        kern,
        grid=(N // nb,),
        in_specs=[
            pl.BlockSpec((nb, L, C), lambda i: (i, 0, 0)),
            pl.BlockSpec((1, C), lambda i: (0, 0)),
            pl.BlockSpec((1, C), lambda i: (0, 0)),
            pl.BlockSpec((C, C), lambda i: (0, 0)),
        ],
        out_specs=pl.BlockSpec((nb, L, C), lambda i: (i, 0, 0)),
        out_shape=jax.ShapeDtypeStruct((N, L, C), x3.dtype),
        scratch_shapes=[pltpu.VMEM((2 * nb, C), jnp.float32)],
        compiler_params=pltpu.CompilerParams(
            dimension_semantics=("parallel",),
            vmem_limit_bytes=_vmem_limit_bytes(tile_bytes, const_bytes)),
        cost_estimate=_cost_estimate(N * L * C, item, N * C, const_bytes),
    )(x3, w2, b2, p)


def _run_channels_first(x3, weight, bias, num_groups, eps):
    """x3: (N, C, L) native dtype; per-(n, group) stats over (C//G, L)."""
    N, C, L = x3.shape
    G = int(num_groups)
    assert C % G == 0, (C, G)
    cg = C // G
    item = x3.dtype.itemsize
    nb = _pick_block_batch(N, L * C * item)

    p = _group_avg_matrix(C, G, L * cg)
    w2 = weight.reshape(C, 1).astype(jnp.float32)
    b2 = bias.reshape(C, 1).astype(jnp.float32)

    tile_bytes = nb * L * C * item
    const_bytes = C * C * 4 + 2 * C * 4 + 2 * nb * C * 4
    kern = functools.partial(_gn_channels_first_kernel, eps=float(eps))

    return pl.pallas_call(
        kern,
        grid=(N // nb,),
        in_specs=[
            pl.BlockSpec((nb, C, L), lambda i: (i, 0, 0)),
            pl.BlockSpec((C, 1), lambda i: (0, 0)),
            pl.BlockSpec((C, 1), lambda i: (0, 0)),
            pl.BlockSpec((C, C), lambda i: (0, 0)),
        ],
        out_specs=pl.BlockSpec((nb, C, L), lambda i: (i, 0, 0)),
        out_shape=jax.ShapeDtypeStruct((N, C, L), x3.dtype),
        scratch_shapes=[pltpu.VMEM((C, 2 * nb), jnp.float32)],
        compiler_params=pltpu.CompilerParams(
            dimension_semantics=("parallel",),
            vmem_limit_bytes=_vmem_limit_bytes(tile_bytes, const_bytes)),
        cost_estimate=_cost_estimate(N * L * C, item, N * C, const_bytes),
    )(x3, w2, b2, p)


# ----------------------------- module wrapper -----------------------------------

def group_norm_local(x, weight, bias, *, num_groups, eps=1e-5,
                     data_format="channels_last"):
    """Forward pass of timm's GroupNormLocal (output dtype == input dtype)."""
    if data_format not in ("channels_last", "channels_first"):
        raise NotImplementedError

    if x.ndim == 2:
        # F.group_norm on (N, C): per-(n, group) stats over C//G channels.
        N, C = x.shape
        y = _run_channels_last(x.reshape(N, 1, C), weight, bias, num_groups, eps)
        return y.reshape(N, C)

    if data_format == "channels_first":
        # F.group_norm on (N, C, *spatial); flatten spatial (contiguous, free reshape).
        N, C = x.shape[0], x.shape[1]
        y = _run_channels_first(x.reshape(N, C, -1), weight, bias, num_groups, eps)
        return y.reshape(x.shape)

    # channels_last: PyTorch permutes to NCHW, runs F.group_norm, permutes back — which
    # is exactly group-norm with per-(n, group) stats over (spatial, C//G) computed
    # directly on the channels-last tensor.
    N, C = x.shape[0], x.shape[-1]
    y = _run_channels_last(x.reshape(N, -1, C), weight, bias, num_groups, eps)
    return y.reshape(x.shape)


# ----------------------------- pure-JAX references -------------------------------

def _ref_channels_last(x, weight, bias, num_groups, eps):
    N, H, W, C = x.shape
    cg = C // num_groups
    xg = x.reshape(N, H * W, num_groups, cg)
    mu = xg.mean(axis=(1, 3), keepdims=True)
    var = ((xg - mu) ** 2).mean(axis=(1, 3), keepdims=True)
    y = ((xg - mu) / jnp.sqrt(var + eps)).reshape(N, H, W, C)
    return y * weight.reshape(1, 1, 1, C) + bias.reshape(1, 1, 1, C)


def _ref_channels_first(x, weight, bias, num_groups, eps):
    N, C, H, W = x.shape
    cg = C // num_groups
    xg = x.reshape(N, num_groups, cg, H, W)
    mu = xg.mean(axis=(2, 3, 4), keepdims=True)
    var = ((xg - mu) ** 2).mean(axis=(2, 3, 4), keepdims=True)
    y = ((xg - mu) / jnp.sqrt(var + eps)).reshape(N, C, H, W)
    return y * weight.reshape(1, C, 1, 1) + bias.reshape(1, C, 1, 1)


def _ref_2d(x, weight, bias, num_groups, eps):
    N, C = x.shape
    cg = C // num_groups
    xg = x.reshape(N, num_groups, cg)
    mu = xg.mean(axis=2, keepdims=True)
    var = ((xg - mu) ** 2).mean(axis=2, keepdims=True)
    return ((xg - mu) / jnp.sqrt(var + eps)).reshape(N, C) * weight + bias


# ----------------------------- main ----------------------------------------------

if __name__ == "__main__":
    N, H, W, C = 2, 16, 16, 128        # C = 128 -> fully lane-dense vregs/stores
    num_groups = 8
    eps = 1e-5

    key = jax.random.PRNGKey(0)
    k0, k1, k2, k3 = jax.random.split(key, 4)
    x_nhwc = jax.random.normal(k0, (N, H, W, C), jnp.float32)
    weight = 1.0 + 0.1 * jax.random.normal(k1, (C,), jnp.float32)
    bias = 0.1 * jax.random.normal(k2, (C,), jnp.float32)

    # --- channels_last (module default), f32 ---
    out = jax.block_until_ready(
        group_norm_local(x_nhwc, weight, bias, num_groups=num_groups, eps=eps))
    ref = _ref_channels_last(x_nhwc, weight, bias, num_groups, eps)
    assert out.shape == x_nhwc.shape and out.dtype == x_nhwc.dtype
    assert bool(jnp.all(jnp.isfinite(out)))
    assert bool(jnp.allclose(out, ref, rtol=1e-4, atol=1e-4)), \
        float(jnp.max(jnp.abs(out - ref)))

    # --- channels_first (in-kernel layout; no transposes around the pallas_call) ---
    x_nchw = jnp.transpose(x_nhwc, (0, 3, 1, 2))
    out_cf = jax.block_until_ready(
        group_norm_local(x_nchw, weight, bias, num_groups=num_groups, eps=eps,
                         data_format="channels_first"))
    ref_cf = _ref_channels_first(x_nchw, weight, bias, num_groups, eps)
    assert out_cf.shape == x_nchw.shape
    assert bool(jnp.allclose(out_cf, ref_cf, rtol=1e-4, atol=1e-4)), \
        float(jnp.max(jnp.abs(out_cf - ref_cf)))

    # --- native bf16 path: bf16 in / bf16 out, no wrapper casts ---
    x_bf16 = x_nhwc.astype(jnp.bfloat16)
    out_bf = jax.block_until_ready(
        group_norm_local(x_bf16, weight, bias, num_groups=num_groups, eps=eps))
    assert out_bf.dtype == jnp.bfloat16
    ref_bf = _ref_channels_last(x_bf16.astype(jnp.float32), weight, bias, num_groups, eps)
    assert bool(jnp.allclose(out_bf.astype(jnp.float32), ref_bf, rtol=3e-2, atol=3e-2)), \
        float(jnp.max(jnp.abs(out_bf.astype(jnp.float32) - ref_bf)))

    # --- 2-D input branch (F.group_norm applied directly) ---
    x2d = jax.random.normal(k3, (4, C), jnp.float32)
    out_2d = jax.block_until_ready(
        group_norm_local(x2d, weight, bias, num_groups=num_groups, eps=eps))
    ref2d = _ref_2d(x2d, weight, bias, num_groups, eps)
    assert bool(jnp.allclose(out_2d, ref2d, rtol=1e-4, atol=1e-4)), \
        float(jnp.max(jnp.abs(out_2d - ref2d)))

    print("KERNEL_OK")
</pallas_src>

<mosaic_0001>
module attributes {stable_mosaic.version = 11 : i64} {
  func.func @_gn_channels_last_kernel(%arg0: i32, %arg1: memref<1x256x128xf32, #tpu.memory_space<vmem>>, %arg2: memref<1x128xf32, #tpu.memory_space<vmem>>, %arg3: memref<1x128xf32, #tpu.memory_space<vmem>>, %arg4: memref<128x128xf32, #tpu.memory_space<vmem>>, %arg5: memref<1x256x128xf32, #tpu.memory_space<vmem>>, %arg6: memref<2x128xf32, #tpu.memory_space<vmem>>) attributes {dimension_semantics = [#tpu.dimension_semantics<parallel>], iteration_bounds = array<i64: 2>, scalar_prefetch = 0 : i64, scratch_operands = 1 : i64, tpu.core_type = #tpu.core_type<tc>, window_params = [{transform_indices = @transform_0, window_bounds = array<i64: 1, 256, 128>}, {pipeline_mode = #tpu.pipeline_mode<synchronous>, transform_indices = @transform_1, window_bounds = array<i64: 1, 128>}, {pipeline_mode = #tpu.pipeline_mode<synchronous>, transform_indices = @transform_2, window_bounds = array<i64: 1, 128>}, {pipeline_mode = #tpu.pipeline_mode<synchronous>, transform_indices = @transform_3, window_bounds = array<i64: 128, 128>}, {transform_indices = @transform_4, window_bounds = array<i64: 1, 256, 128>}]} {
    %c0 = arith.constant 0 : index
    %c0_0 = arith.constant 0 : index
    %c0_1 = arith.constant 0 : index
    %0 = vector.load %arg1[%c0, %c0_0, %c0_1] : memref<1x256x128xf32, #tpu.memory_space<vmem>>, vector<1x256x128xf32>
    %1 = vector.shape_cast %0 : vector<1x256x128xf32> to vector<256x128xf32>
    %cst = arith.constant dense<0.000000e+00> : vector<128xf32>
    %2 = vector.multi_reduction <add>, %1, %cst [0] : vector<256x128xf32> to vector<128xf32>
    %3 = vector.shape_cast %2 : vector<128xf32> to vector<1x128xf32>
    %c0_2 = arith.constant 0 : index
    %c0_3 = arith.constant 0 : index
    %4 = vector.load %arg6[%c0_2, %c0_3] : memref<2x128xf32, #tpu.memory_space<vmem>>, vector<1x128xf32>
    tpu.vector_store %arg6[%c0_2, %c0_3], %3 {strides = array<i32>} : memref<2x128xf32, #tpu.memory_space<vmem>>, vector<1x128xf32>,
    %5 = arith.mulf %1, %1 : vector<256x128xf32>
    %cst_4 = arith.constant dense<0.000000e+00> : vector<128xf32>
    %6 = vector.multi_reduction <add>, %5, %cst_4 [0] : vector<256x128xf32> to vector<128xf32>
    %7 = vector.shape_cast %6 : vector<128xf32> to vector<1x128xf32>
    %c1 = arith.constant 1 : index
    %c0_5 = arith.constant 0 : index
    %8 = vector.load %arg6[%c1, %c0_5] : memref<2x128xf32, #tpu.memory_space<vmem>>, vector<1x128xf32>
    tpu.vector_store %arg6[%c1, %c0_5], %7 {strides = array<i32>} : memref<2x128xf32, #tpu.memory_space<vmem>>, vector<1x128xf32>,
    %c0_6 = arith.constant 0 : index
    %c0_7 = arith.constant 0 : index
    %9 = vector.load %arg6[%c0_6, %c0_7] : memref<2x128xf32, #tpu.memory_space<vmem>>, vector<2x128xf32>
    %c0_8 = arith.constant 0 : index
    %c0_9 = arith.constant 0 : index
    %10 = vector.load %arg4[%c0_8, %c0_9] : memref<128x128xf32, #tpu.memory_space<vmem>>, vector<128x128xf32>
    %cst_10 = arith.constant dense<0.000000e+00> : vector<2x128xf32>
    %11 = tpu.matmul %9, %10, %cst_10 {dimension_numbers = #tpu.dot_dimension_numbers<[1], [0], [0], [1], [0, 0, 1, 1], [], []>, precision = #tpu.contract_precision<fp32>} : vector<2x128xf32>, vector<128x128xf32>, vector<2x128xf32> -> vector<2x128xf32>
    %12 = vector.extract_strided_slice %11 {offsets = [0, 0], sizes = [1, 128], strides = [1, 1]} : vector<2x128xf32> to vector<1x128xf32>
    %13 = vector.extract_strided_slice %11 {offsets = [1, 0], sizes = [1, 128], strides = [1, 1]} : vector<2x128xf32> to vector<1x128xf32>
    %14 = arith.mulf %12, %12 : vector<1x128xf32>
    %15 = arith.subf %13, %14 : vector<1x128xf32>
    %cst_11 = arith.constant 0.000000e+00 : f32
    %16 = vector.broadcast %cst_11 : f32 to vector<1x128xf32>
    %17 = arith.maximumf %15, %16 : vector<1x128xf32>
    %cst_12 = arith.constant 9.99999974E-6 : f32
    %18 = vector.broadcast %cst_12 : f32 to vector<1x128xf32>
    %19 = arith.addf %17, %18 : vector<1x128xf32>
    %20 = math.rsqrt %19 : vector<1x128xf32>
    %c0_13 = arith.constant 0 : index
    %c0_14 = arith.constant 0 : index
    %21 = vector.load %arg2[%c0_13, %c0_14] : memref<1x128xf32, #tpu.memory_space<vmem>>, vector<1x128xf32>
    %22 = arith.mulf %20, %21 : vector<1x128xf32>
    %c0_15 = arith.constant 0 : index
    %c0_16 = arith.constant 0 : index
    %23 = vector.load %arg3[%c0_15, %c0_16] : memref<1x128xf32, #tpu.memory_space<vmem>>, vector<1x128xf32>
    %24 = arith.mulf %12, %22 : vector<1x128xf32>
    %25 = arith.subf %23, %24 : vector<1x128xf32>
    %c0_17 = arith.constant 0 : index
    %c0_18 = arith.constant 0 : index
    %c0_19 = arith.constant 0 : index
    %26 = vector.load %arg1[%c0_17, %c0_18, %c0_19] : memref<1x256x128xf32, #tpu.memory_space<vmem>>, vector<1x256x128xf32>
    %27 = vector.shape_cast %26 : vector<1x256x128xf32> to vector<256x128xf32>
    %28 = vector.broadcast %22 : vector<1x128xf32> to vector<256x128xf32>
    %29 = arith.mulf %27, %28 : vector<256x128xf32>
    %30 = vector.broadcast %25 : vector<1x128xf32> to vector<256x128xf32>
    %31 = arith.addf %29, %30 : vector<256x128xf32>
    %c0_20 = arith.constant 0 : index
    %c0_21 = arith.constant 0 : index
    %c0_22 = arith.constant 0 : index
    %32 = vector.load %arg5[%c0_20, %c0_21, %c0_22] : memref<1x256x128xf32, #tpu.memory_space<vmem>>, vector<1x256x128xf32>
    %33 = vector.shape_cast %32 : vector<1x256x128xf32> to vector<256x128xf32>
    %34 = vector.shape_cast %31 : vector<256x128xf32> to vector<1x256x128xf32>
    tpu.vector_store %arg5[%c0_20, %c0_21, %c0_22], %34 {strides = array<i32>} : memref<1x256x128xf32, #tpu.memory_space<vmem>>, vector<1x256x128xf32>,
    return
  }
  func.func @transform_0(%arg0: i32) -> (i32, i32, i32) {
    %c0_i32 = arith.constant 0 : i32
    %c0_i32_0 = arith.constant 0 : i32
    %c0_i32_1 = arith.constant 0 : i32
    return %arg0, %c0_i32, %c0_i32_0 : i32, i32, i32
  }
  func.func @transform_1(%arg0: i32) -> (i32, i32) {
    %c0_i32 = arith.constant 0 : i32
    %c0_i32_0 = arith.constant 0 : i32
    %c0_i32_1 = arith.constant 0 : i32
    return %c0_i32, %c0_i32_0 : i32, i32
  }
  func.func @transform_2(%arg0: i32) -> (i32, i32) {
    %c0_i32 = arith.constant 0 : i32
    %c0_i32_0 = arith.constant 0 : i32
    %c0_i32_1 = arith.constant 0 : i32
    return %c0_i32, %c0_i32_0 : i32, i32
  }
  func.func @transform_3(%arg0: i32) -> (i32, i32) {
    %c0_i32 = arith.constant 0 : i32
    %c0_i32_0 = arith.constant 0 : i32
    %c0_i32_1 = arith.constant 0 : i32
    return %c0_i32, %c0_i32_0 : i32, i32
  }
  func.func @transform_4(%arg0: i32) -> (i32, i32, i32) {
    %c0_i32 = arith.constant 0 : i32
    %c0_i32_0 = arith.constant 0 : i32
    %c0_i32_1 = arith.constant 0 : i32
    return %arg0, %c0_i32, %c0_i32_0 : i32, i32, i32
  }
}

</mosaic_0001>

<llo_original>
// kernel: tpu_custom_call.1
$region0: #{tpu_custom_call.1}
  #allocation0 [shape = 'u32[]', space=smem, size = 0x4, offset = 0x4, fixed_abs, tag = 'smem constant byte address 0x4 - core index']
  #allocation1 [shape = 'u32[144,128]{1,0:T(1,128)}', space=vmem, size = 0x12000, scoped, tag = 'internal scratch']
  #allocation2 [shape = 'f32[2,128]{1,0:T(2,128)}', space=vmem, size = 0x400, scoped, tag = 'scratch operand']
  %s0 = inlined_call_operand.hbm [shape: f32[2,256,128], index: 0, kind: input, shape index: {}]
  %s1 = inlined_call_operand.vmem [shape: f32[1,128], index: 1, kind: input, shape index: {}]
  %s2 = inlined_call_operand.vmem [shape: f32[1,128], index: 2, kind: input, shape index: {}]
  %s3 = inlined_call_operand.hbm [shape: f32[128,128], index: 3, kind: input, shape index: {}]
  %s4 = inlined_call_operand.hbm [shape: f32[2,256,128], index: 4, kind: output, shape index: {}]
  %s5 = sld [smem:[#allocation0]]
  $region57: #{tpu_custom_call.1} parent=0
    _
  %s7 = ssub.s32 1, %s5
  %s8 = scalar_select 0, %s7, %s5
  $region1: #{tpu_custom_call.1} parent=0
    #allocation3 [shape = 'u8[262144]{0}', space=vmem, size = 0x40000, scoped, tag = 'input window, operand 0']
    #allocation4 [shape = 's32[2]{0}', space=sflag, size = 0x8, scoped, tag = 'scoped memory for tpu_custom_call.1']
    #allocation5 [shape = 's32[2]{0}', space=sflag, size = 0x8, scoped, tag = 'scoped memory for tpu_custom_call.1']
    #allocation6 [shape = 'u8[65536]{0}', space=vmem, size = 0x10000, scoped, tag = 'input window, operand 3, single buffered']
    #allocation7 [shape = 's32[1]{0}', space=sflag, size = 0x4, scoped, tag = 'scoped memory for tpu_custom_call.1']
    #allocation8 [shape = 'u8[262144]{0}', space=vmem, size = 0x40000, scoped, tag = 'output window, operand 0']
    %9 = vsyncpa [#allocation4], 0
    %s10 = scalar_lea.sflag [#allocation4], 1
    %11 = vsyncpa %s10, 0
    %12 = vsyncpa [#allocation7], 0
    %13 = vsyncpa [#allocation5], 0
    %s14 = scalar_lea.sflag [#allocation5], 1
    %15 = vsyncpa %s14, 0
    loop: start=0, step=1, limit=4
    $region2: #{tpu_custom_call.1} parent=1 // loop_pre_header
      _
    $region3: #{tpu_custom_call.1} parent=1 // loop_header
      %s17 = sphi 0, %s21
      %p18 = scmp.ge.s32.totalorder %s17, 4
      %s27 = sphi 0, %s29
      %s30 = sphi 0, %s27
      %s31 = sphi 0, %s30
      %s47 = sphi 0, %s31
      %s51 = sphi 0, %s51
      %s53 = sphi 0, %s51
      %s54 = sphi 0, %s53
      %s68 = sphi 0, %s54
      %s72 = sphi 0, %s72
      %s74 = sphi 0, %s72
      %s75 = sphi 0, %s74
      %s89 = sphi 0, %s75
      %s93 = sphi 0, %s93
      %s95 = sphi 0, %s93
      %s96 = sphi 0, %s95
      %s110 = sphi 0, %s96
      %s116 = sphi 0, %s118
      %s119 = sphi 0, %s116
      %s120 = sphi 0, %s119
      %s136 = sphi 0, %s120
    $region4: #{tpu_custom_call.1} parent=1 // loop_header_branch
      %20 = sbr.rel (%p18) target = $region8
    $region5: #{tpu_custom_call.1} parent=1 // loop_body
      %s22 = ssub.s32 %s17, 1
      %s23 = ssub.s32 %s17, 2
      %s24 = sadd.s32 %s17, 1
      %s25 = ssub.s32 %s17, %s24
      %p26 = scmp.eq.s32.totalorder %s25, 0
      %s28 = sadd.s32 %s27, 1
      %s29 = scalar_select %p26, %s27, %s28
      %p32 = pneg %p26
      %p33 = scmp.eq.s32.totalorder %s17, 1
      %p34 = por %p32, %p33
      %p35 = scmp.ne.s32.totalorder %s27, %s30
      %p36 = scmp.eq.s32.totalorder %s17, 0
      %p37 = por %p35, %p36
      %p38 = scmp.ne.s32.totalorder %s27, %s30
      %p39 = scmp.eq.s32.totalorder %s22, 1
      %p40 = por %p38, %p39
      %p41 = scmp.ne.s32.totalorder %s30, %s31
      %p42 = scmp.eq.s32.totalorder %s22, 0
      %p43 = por %p41, %p42
      %p44 = scmp.ne.s32.totalorder %s30, %s31
      %p45 = scmp.eq.s32.totalorder %s23, 1
      %p46 = por %p44, %p45
      %p48 = scmp.ne.s32.totalorder %s31, %s47
      %p49 = scmp.eq.s32.totalorder %s23, 0
      %p50 = por %p48, %p49
      %s52 = sadd.s32 %s51, 1
      %p55 = scmp.eq.s32.totalorder %s17, 1
      %p56 = scmp.ne.s32.totalorder %s51, %s53
      %p57 = scmp.eq.s32.totalorder %s17, 0
      %p58 = por %p56, %p57
      %p59 = scmp.ne.s32.totalorder %s51, %s53
      %p60 = scmp.eq.s32.totalorder %s22, 1
      %p61 = por %p59, %p60
      %p62 = scmp.ne.s32.totalorder %s53, %s54
      %p63 = scmp.eq.s32.totalorder %s22, 0
      %p64 = por %p62, %p63
      %p65 = scmp.ne.s32.totalorder %s53, %s54
      %p66 = scmp.eq.s32.totalorder %s23, 1
      %p67 = por %p65, %p66
      %p69 = scmp.ne.s32.totalorder %s54, %s68
      %p70 = scmp.eq.s32.totalorder %s23, 0
      %p71 = por %p69, %p70
      %s73 = sadd.s32 %s72, 1
      %p76 = scmp.eq.s32.totalorder %s17, 1
      %p77 = scmp.ne.s32.totalorder %s72, %s74
      %p78 = scmp.eq.s32.totalorder %s17, 0
      %p79 = por %p77, %p78
      %p80 = scmp.ne.s32.totalorder %s72, %s74
      %p81 = scmp.eq.s32.totalorder %s22, 1
      %p82 = por %p80, %p81
      %p83 = scmp.ne.s32.totalorder %s74, %s75
      %p84 = scmp.eq.s32.totalorder %s22, 0
      %p85 = por %p83, %p84
      %p86 = scmp.ne.s32.totalorder %s74, %s75
      %p87 = scmp.eq.s32.totalorder %s23, 1
      %p88 = por %p86, %p87
      %p90 = scmp.ne.s32.totalorder %s75, %s89
      %p91 = scmp.eq.s32.totalorder %s23, 0
      %p92 = por %p90, %p91
      %s94 = sadd.s32 %s93, 1
      %p97 = scmp.eq.s32.totalorder %s17, 1
      %p98 = scmp.ne.s32.totalorder %s93, %s95
      %p99 = scmp.eq.s32.totalorder %s17, 0
      %p100 = por %p98, %p99
      %p101 = scmp.ne.s32.totalorder %s93, %s95
      %p102 = scmp.eq.s32.totalorder %s22, 1
      %p103 = por %p101, %p102
      %p104 = scmp.ne.s32.totalorder %s95, %s96
      %p105 = scmp.eq.s32.totalorder %s22, 0
      %p106 = por %p104, %p105
      %p107 = scmp.ne.s32.totalorder %s95, %s96
      %p108 = scmp.eq.s32.totalorder %s23, 1
      %p109 = por %p107, %p108
      %p111 = scmp.ne.s32.totalorder %s96, %s110
      %p112 = scmp.eq.s32.totalorder %s23, 0
      %p113 = por %p111, %p112
      %s114 = ssub.s32 %s17, %s24
      %p115 = scmp.eq.s32.totalorder %s114, 0
      %s117 = sadd.s32 %s116, 1
      %s118 = scalar_select %p115, %s116, %s117
      %p121 = pneg %p115
      %p122 = scmp.eq.s32.totalorder %s17, 1
      %p123 = por %p121, %p122
      %p124 = scmp.ne.s32.totalorder %s116, %s119
      %p125 = scmp.eq.s32.totalorder %s17, 0
      %p126 = por %p124, %p125
      %p127 = scmp.ne.s32.totalorder %s116, %s119
      %p128 = scmp.eq.s32.totalorder %s22, 1
      %p129 = por %p127, %p128
      %p130 = scmp.ne.s32.totalorder %s119, %s120
      %p131 = scmp.eq.s32.totalorder %s22, 0
      %p132 = por %p130, %p131
      %p133 = scmp.ne.s32.totalorder %s119, %s120
      %p134 = scmp.eq.s32.totalorder %s23, 1
      %p135 = por %p133, %p134
      %p137 = scmp.ne.s32.totalorder %s120, %s136
      %p138 = scmp.eq.s32.totalorder %s23, 0
      %p139 = por %p137, %p138
      %p140 = scmp.le.s32.totalorder 1, %s17
      %p141 = scmp.lt.s32.totalorder %s17, 3
      %p142 = pnand %p140, %p141
      %p143 = pneg %p142
      // Predicated region
      $region9: #{tpu_custom_call.1} parent=5 // pred_check
        _
      $region10: #{tpu_custom_call.1} parent=5 // pred_check_branch
        %145 = sbr.rel (%p142) target = $region12
      $region11: #{tpu_custom_call.1} parent=5 // pred_region
        %s146 = ssub.s32 %s17, 1
        // Predicated region
        $region13: #{tpu_custom_call.1} parent=11 // pred_check
          %p147 = pneg %p64
        $region14: #{tpu_custom_call.1} parent=11 // pred_check_branch
          %149 = sbr.rel (%p147) target = $region16
        $region15: #{tpu_custom_call.1} parent=11 // pred_region
          _
        $region16: #{tpu_custom_call.1} parent=11 // pred_fallthru
          _
        // Predicated region
        $region17: #{tpu_custom_call.1} parent=11 // pred_check
          %p150 = pneg %p85
        $region18: #{tpu_custom_call.1} parent=11 // pred_check_branch
          %152 = sbr.rel (%p150) target = $region20
        $region19: #{tpu_custom_call.1} parent=11 // pred_region
          _
        $region20: #{tpu_custom_call.1} parent=11 // pred_fallthru
          _
        // Predicated region
        $region21: #{tpu_custom_call.1} parent=11 // pred_check
          %p153 = pneg %p106
        $region22: #{tpu_custom_call.1} parent=11 // pred_check_branch
          %155 = sbr.rel (%p153) target = $region24
        $region23: #{tpu_custom_call.1} parent=11 // pred_region
          %s157 = ssub.s32 2048, 2048
          %158 = vsyncadd [#allocation7], %s157
          %s159 = sshll.u32 [#allocation6], 4
          %s160 = int_to_ptr.vmem [resolvable:$true] %s159
          %165 = dma.hbm_to_vmem [thread:$0]  %s3, 2048, %s160, [#allocation7], 128, 128, 8
        $region24: #{tpu_custom_call.1} parent=11 // pred_fallthru
          _
      $region12: #{tpu_custom_call.1} parent=5 // pred_fallthru
        _
      %p166 = scmp.lt.s32.totalorder %s17, 2
      // Predicated region
      $region25: #{tpu_custom_call.1} parent=5 // pred_check
        %p167 = pneg %p166
      $region26: #{tpu_custom_call.1} parent=5 // pred_check_branch
        %169 = sbr.rel (%p167) target = $region28
      $region27: #{tpu_custom_call.1} parent=5 // pred_region
        // Predicated region
        $region29: #{tpu_custom_call.1} parent=27 // pred_check
          %p170 = pneg %p37
        $region30: #{tpu_custom_call.1} parent=27 // pred_check_branch
          %172 = sbr.rel (%p170) target = $region32
        $region31: #{tpu_custom_call.1} parent=27 // pred_region
          %s173 = sand.u32 %s27, 1
          %s174 = scalar_lea.sflag [#allocation4], %s173
          %s175 = sand.u32 %s27, 1
          %s176 = smul.addr %s175, 256
          %s177 = scalar_lea.vmem [#allocation3], %s176
          %s179 = ssub.s32 4096, 4096
          %180 = vsyncadd %s174, %s179
          %s181 = smul.addr %s17, 32
          %s182 = smul.addr %s181, 128
          %s183 = scalar_lea.hbm %s0, %s182
          %s184 = sshll.u32 %s177, 4
          %s185 = int_to_ptr.vmem [resolvable:$true] %s184
          %190 = dma.hbm_to_vmem [thread:$0]  %s183, 4096, %s185, %s174, 128, 128, 8
        $region32: #{tpu_custom_call.1} parent=27 // pred_fallthru
          _
      $region28: #{tpu_custom_call.1} parent=5 // pred_fallthru
        _
      %p191 = scmp.le.s32.totalorder 1, %s17
      %p192 = scmp.lt.s32.totalorder %s17, 3
      %p193 = pnand %p191, %p192
      %p194 = pneg %p193
      // Predicated region
      $region33: #{tpu_custom_call.1} parent=5 // pred_check
        _
      $region34: #{tpu_custom_call.1} parent=5 // pred_check_branch
        %196 = sbr.rel (%p193) target = $region36
      $region35: #{tpu_custom_call.1} parent=5 // pred_region
        %s197 = ssub.s32 %s17, 1
        %s198 = sand.u32 %s30, 1
        %s199 = scalar_lea.sflag [#allocation4], %s198
        %s200 = sand.u32 %s30, 1
        %s201 = smul.addr %s200, 256
        %s202 = scalar_lea.vmem [#allocation3], %s201
        // Predicated region
        $region37: #{tpu_custom_call.1} parent=35 // pred_check
          %p203 = pneg %p43
        $region38: #{tpu_custom_call.1} parent=35 // pred_check_branch
          %205 = sbr.rel (%p203) target = $region40
        $region39: #{tpu_custom_call.1} parent=35 // pred_region
          %206 = dma.done %s199, 4096
        $region40: #{tpu_custom_call.1} parent=35 // pred_fallthru
          _
        // Predicated region
        $region41: #{tpu_custom_call.1} parent=35 // pred_check
          %p207 = pneg %p106
        $region42: #{tpu_custom_call.1} parent=35 // pred_check_branch
          %209 = sbr.rel (%p207) target = $region44
        $region43: #{tpu_custom_call.1} parent=35 // pred_region
          %210 = dma.done [#allocation7], 2048
        $region44: #{tpu_custom_call.1} parent=35 // pred_fallthru
          _
        %s211 = sand.u32 %s30, 1
        %s212 = scalar_lea.sflag [#allocation4], %s211
        %s213 = sand.u32 %s30, 1
        %s214 = smul.addr %s213, 256
        %s215 = scalar_lea.vmem [#allocation3], %s214
        %p216 = pneg %p43
        %p217 = pneg %p40
        %p218 = pneg %p64
        %p219 = pneg %p61
        %p220 = pneg %p85
        %p221 = pneg %p82
        %p222 = pneg %p106
        %p223 = pneg %p103
        %p224 = pneg %p132
        %p225 = pneg %p129
        %s226 = sand.u32 %s119, 1
        %s227 = scalar_lea.sflag [#allocation5], %s226
        %s228 = sand.u32 %s119, 1
        %s229 = smul.addr %s228, 256
        %s230 = scalar_lea.vmem [#allocation8], %s229
        %v231 = vld [vmem:[%s202] sm:$0xff]
        %v232 = vld [vmem:[%s202 + $0x8] sm:$0xff]
        %v233 = vld [vmem:[%s202 + $0x10] sm:$0xff]
        %v234 = vld [vmem:[%s202 + $0x18] sm:$0xff]
        %v235 = vld [vmem:[%s202 + $0x20] sm:$0xff]
        %v236 = vld [vmem:[%s202 + $0x28] sm:$0xff]
        %v237 = vld [vmem:[%s202 + $0x30] sm:$0xff]
        %v238 = vld [vmem:[%s202 + $0x38] sm:$0xff]
        %v239 = vld [vmem:[%s202 + $0x40] sm:$0xff]
        %v240 = vld [vmem:[%s202 + $0x48] sm:$0xff]
        %v241 = vld [vmem:[%s202 + $0x50] sm:$0xff]
        %v242 = vld [vmem:[%s202 + $0x58] sm:$0xff]
        %v243 = vld [vmem:[%s202 + $0x60] sm:$0xff]
        %v244 = vld [vmem:[%s202 + $0x68] sm:$0xff]
        %v245 = vld [vmem:[%s202 + $0x70] sm:$0xff]
        %v246 = vld [vmem:[%s202 + $0x78] sm:$0xff]
        %v247 = vld [vmem:[%s202 + $0x80] sm:$0xff]
        %v248 = vld [vmem:[%s202 + $0x88] sm:$0xff]
        %v249 = vld [vmem:[%s202 + $0x90] sm:$0xff]
        %v250 = vld [vmem:[%s202 + $0x98] sm:$0xff]
        %v251 = vld [vmem:[%s202 + $0xa0] sm:$0xff]
        %v252 = vld [vmem:[%s202 + $0xa8] sm:$0xff]
        %v253 = vld [vmem:[%s202 + $0xb0] sm:$0xff]
        %v254 = vld [vmem:[%s202 + $0xb8] sm:$0xff]
        %v255 = vld [vmem:[%s202 + $0xc0] sm:$0xff]
        %v256 = vld [vmem:[%s202 + $0xc8] sm:$0xff]
        %v257 = vld [vmem:[%s202 + $0xd0] sm:$0xff]
        %v258 = vld [vmem:[%s202 + $0xd8] sm:$0xff]
        %v259 = vld [vmem:[%s202 + $0xe0] sm:$0xff]
        %v260 = vld [vmem:[%s202 + $0xe8] sm:$0xff]
        %v261 = vld [vmem:[%s202 + $0xf0] sm:$0xff]
        %v262 = vld [vmem:[%s202 + $0xf8] sm:$0xff]
        %v263 = vadd.f32 %v231, %v232
        %v264 = vadd.f32 %v263, %v233
        %v265 = vadd.f32 %v264, %v234
        %v266 = vadd.f32 %v265, %v235
        %v267 = vadd.f32 %v266, %v236
        %v268 = vadd.f32 %v267, %v237
        %v269 = vadd.f32 %v268, %v238
        %v270 = vadd.f32 %v269, %v239
        %v271 = vadd.f32 %v270, %v240
        %v272 = vadd.f32 %v271, %v241
        %v273 = vadd.f32 %v272, %v242
        %v274 = vadd.f32 %v273, %v243
        %v275 = vadd.f32 %v274, %v244
        %v276 = vadd.f32 %v275, %v245
        %v277 = vadd.f32 %v276, %v246
        %v278 = vadd.f32 %v277, %v247
        %v279 = vadd.f32 %v278, %v248
        %v280 = vadd.f32 %v279, %v249
        %v281 = vadd.f32 %v280, %v250
        %v282 = vadd.f32 %v281, %v251
        %v283 = vadd.f32 %v282, %v252
        %v284 = vadd.f32 %v283, %v253
        %v285 = vadd.f32 %v284, %v254
        %v286 = vadd.f32 %v285, %v255
        %v287 = vadd.f32 %v286, %v256
        %v288 = vadd.f32 %v287, %v257
        %v289 = vadd.f32 %v288, %v258
        %v290 = vadd.f32 %v289, %v259
        %v291 = vadd.f32 %v290, %v260
        %v292 = vadd.f32 %v291, %v261
        %v293 = vadd.f32 %v292, %v262
        %v294 = vrot.slane %v293, 4
        %v295 = vadd.f32 %v293, %v294
        %v296 = vrot.slane %v295, 2
        %v297 = vadd.f32 %v295, %v296
        %v298 = vrot.slane %v297, 1
        %v299 = vadd.f32 %v297, %v298
        %300 = vst [vmem:[#allocation2] sm:$0x1] %v299
        %v301 = vmul.f32 %v231, %v231
        %v302 = vmul.f32 %v232, %v232
        %v303 = vmul.f32 %v233, %v233
        %v304 = vmul.f32 %v234, %v234
        %v305 = vmul.f32 %v235, %v235
        %v306 = vmul.f32 %v236, %v236
        %v307 = vmul.f32 %v237, %v237
        %v308 = vmul.f32 %v238, %v238
        %v309 = vmul.f32 %v239, %v239
        %v310 = vmul.f32 %v240, %v240
        %v311 = vmul.f32 %v241, %v241
        %v312 = vmul.f32 %v242, %v242
        %v313 = vmul.f32 %v243, %v243
        %v314 = vmul.f32 %v244, %v244
        %v315 = vmul.f32 %v245, %v245
        %v316 = vmul.f32 %v246, %v246
        %v317 = vmul.f32 %v247, %v247
        %v318 = vmul.f32 %v248, %v248
        %v319 = vmul.f32 %v249, %v249
        %v320 = vmul.f32 %v250, %v250
        %v321 = vmul.f32 %v251, %v251
        %v322 = vmul.f32 %v252, %v252
        %v323 = vmul.f32 %v253, %v253
        %v324 = vmul.f32 %v254, %v254
        %v325 = vmul.f32 %v255, %v255
        %v326 = vmul.f32 %v256, %v256
        %v327 = vmul.f32 %v257, %v257
        %v328 = vmul.f32 %v258, %v258
        %v329 = vmul.f32 %v259, %v259
        %v330 = vmul.f32 %v260, %v260
        %v331 = vmul.f32 %v261, %v261
        %v332 = vmul.f32 %v262, %v262
        %v333 = vadd.f32 %v301, %v302
        %v334 = vadd.f32 %v333, %v303
        %v335 = vadd.f32 %v334, %v304
        %v336 = vadd.f32 %v335, %v305
        %v337 = vadd.f32 %v336, %v306
        %v338 = vadd.f32 %v337, %v307
        %v339 = vadd.f32 %v338, %v308
        %v340 = vadd.f32 %v339, %v309
        %v341 = vadd.f32 %v340, %v310
        %v342 = vadd.f32 %v341, %v311
        %v343 = vadd.f32 %v342, %v312
        %v344 = vadd.f32 %v343, %v313
        %v345 = vadd.f32 %v344, %v314
        %v346 = vadd.f32 %v345, %v315
        %v347 = vadd.f32 %v346, %v316
        %v348 = vadd.f32 %v347, %v317
        %v349 = vadd.f32 %v348, %v318
        %v350 = vadd.f32 %v349, %v319
        %v351 = vadd.f32 %v350, %v320
        %v352 = vadd.f32 %v351, %v321
        %v353 = vadd.f32 %v352, %v322
        %v354 = vadd.f32 %v353, %v323
        %v355 = vadd.f32 %v354, %v324
        %v356 = vadd.f32 %v355, %v325
        %v357 = vadd.f32 %v356, %v326
        %v358 = vadd.f32 %v357, %v327
        %v359 = vadd.f32 %v358, %v328
        %v360 = vadd.f32 %v359, %v329
        %v361 = vadd.f32 %v360, %v330
        %v362 = vadd.f32 %v361, %v331
        %v363 = vadd.f32 %v362, %v332
        %v364 = vrot.slane %v363, 4
        %v365 = vadd.f32 %v363, %v364
        %v366 = vrot.slane %v365, 2
        %v367 = vadd.f32 %v365, %v366
        %v368 = vrot.slane %v367, 1
        %v369 = vadd.f32 %v367, %v368
        %370 = vst [vmem:[#allocation2 + $0x1] sm:$0x1] %v369
        %v371 = vld [vmem:[#allocation2] sm:$0x3]
        %v372 = vld [vmem:[#allocation6] sm:$0xff]
        %v373 = vld [vmem:[#allocation6 + $0x8] sm:$0xff]
        %v374 = vld [vmem:[#allocation6 + $0x10] sm:$0xff]
        %v375 = vld [vmem:[#allocation6 + $0x18] sm:$0xff]
        %v376 = vld [vmem:[#allocation6 + $0x20] sm:$0xff]
        %v377 = vld [vmem:[#allocation6 + $0x28] sm:$0xff]
        %v378 = vld [vmem:[#allocation6 + $0x30] sm:$0xff]
        %v379 = vld [vmem:[#allocation6 + $0x38] sm:$0xff]
        %v380 = vld [vmem:[#allocation6 + $0x40] sm:$0xff]
        %v381 = vld [vmem:[#allocation6 + $0x48] sm:$0xff]
        %v382 = vld [vmem:[#allocation6 + $0x50] sm:$0xff]
        %v383 = vld [vmem:[#allocation6 + $0x58] sm:$0xff]
        %v384 = vld [vmem:[#allocation6 + $0x60] sm:$0xff]
        %v385 = vld [vmem:[#allocation6 + $0x68] sm:$0xff]
        %v386 = vld [vmem:[#allocation6 + $0x70] sm:$0xff]
        %v387 = vld [vmem:[#allocation6 + $0x78] sm:$0xff]
        %388 = vmatprep.subr.mxu0 0.0
        %v389 = vand.u32 %v372, 4294901760
        %390 = vmatpush1.msra.mxu0 %v389
        %391 = vmatprep.subr.mxu0 0.0
        %v392 = vand.u32 %v373, 4294901760
        %393 = vmatpush1.msra.mxu0 %v392
        %394 = vmatprep.subr.mxu0 0.0
        %v395 = vand.u32 %v374, 4294901760
        %396 = vmatpush1.msra.mxu0 %v395
        %397 = vmatprep.subr.mxu0 0.0
        %v398 = vand.u32 %v375, 4294901760
        %399 = vmatpush1.msra.mxu0 %v398
        %400 = vmatprep.subr.mxu0 0.0
        %v401 = vand.u32 %v376, 4294901760
        %402 = vmatpush1.msra.mxu0 %v401
        %403 = vmatprep.subr.mxu0 0.0
        %v404 = vand.u32 %v377, 4294901760
        %405 = vmatpush1.msra.mxu0 %v404
        %406 = vmatprep.subr.mxu0 0.0
        %v407 = vand.u32 %v378, 4294901760
        %408 = vmatpush1.msra.mxu0 %v407
        %409 = vmatprep.subr.mxu0 0.0
        %v410 = vand.u32 %v379, 4294901760
        %411 = vmatpush1.msra.mxu0 %v410
        %412 = vmatprep.subr.mxu0 0.0
        %v413 = vand.u32 %v380, 4294901760
        %414 = vmatpush1.msra.mxu0 %v413
        %415 = vmatprep.subr.mxu0 0.0
        %v416 = vand.u32 %v381, 4294901760
        %417 = vmatpush1.msra.mxu0 %v416
        %418 = vmatprep.subr.mxu0 0.0
        %v419 = vand.u32 %v382, 4294901760
        %420 = vmatpush1.msra.mxu0 %v419
        %421 = vmatprep.subr.mxu0 0.0
        %v422 = vand.u32 %v383, 4294901760
        %423 = vmatpush1.msra.mxu0 %v422
        %424 = vmatprep.subr.mxu0 0.0
        %v425 = vand.u32 %v384, 4294901760
        %426 = vmatpush1.msra.mxu0 %v425
        %427 = vmatprep.subr.mxu0 0.0
        %v428 = vand.u32 %v385, 4294901760
        %429 = vmatpush1.msra.mxu0 %v428
        %430 = vmatprep.subr.mxu0 0.0
        %v431 = vand.u32 %v386, 4294901760
        %432 = vmatpush1.msra.mxu0 %v431
        %433 = vmatprep.subr.mxu0 0.0
        %v434 = vand.u32 %v387, 4294901760
        %435 = vmatpush1.msra.mxu0 %v434
        %436 = vmatprep.subr.mxu0 0.0
        %437 = vmatpush1.msra.mxu0 0.0
        %438 = vmatprep.subr.mxu0 0.0
        %439 = vmatpush1.msra.mxu0 0.0
        %440 = vmatprep.subr.mxu0 0.0
        %441 = vmatpush1.msra.mxu0 0.0
        %442 = vmatprep.subr.mxu0 0.0
        %443 = vmatpush1.msra.mxu0 0.0
        %444 = vmatprep.subr.mxu0 0.0
        %445 = vmatpush1.msra.mxu0 0.0
        %446 = vmatprep.subr.mxu0 0.0
        %447 = vmatpush1.msra.mxu0 0.0
        %448 = vmatprep.subr.mxu0 0.0
        %449 = vmatpush1.msra.mxu0 0.0
        %450 = vmatprep.subr.mxu0 0.0
        %451 = vmatpush1.msra.mxu0 0.0
        %452 = vmatprep.subr.mxu0 0.0
        %453 = vmatpush1.msra.mxu0 0.0
        %454 = vmatprep.subr.mxu0 0.0
        %455 = vmatpush1.msra.mxu0 0.0
        %456 = vmatprep.subr.mxu0 0.0
        %457 = vmatpush1.msra.mxu0 0.0
        %458 = vmatprep.subr.mxu0 0.0
        %459 = vmatpush1.msra.mxu0 0.0
        %460 = vmatprep.subr.mxu0 0.0
        %461 = vmatpush1.msra.mxu0 0.0
        %462 = vmatprep.subr.mxu0 0.0
        %463 = vmatpush1.msra.mxu0 0.0
        %464 = vmatprep.subr.mxu0 0.0
        %465 = vmatpush1.msra.mxu0 0.0
        %466 = vmatprep.subr.mxu0 0.0
        %467 = vmatpush1.msra.mxu0 0.0
        %468 = vmatprep.mubr.f32.mxu0 0.0
        %v469 = vand.u32 %v371, 4294901760
        %v470 = vsub.f32 %v371, %v469
        %v471 = vand.u32 %v470, 4294901760
        %v472 = vsub.f32 %v470, %v471
        %v473 = vand.u32 %v472, 4294901760
        %474 = vmatmul.mubr.f32.gmra.mrb[0].mxu0 %v473
        %v475 = vpop.f32.mrb[0].mxu0
        %v476 = vadd.f32 0.0, %v475
        %v477 = vpop.f32.mrb[0].mxu0
        %478 = vdwg.mxu0
        %479 = vmatprep.subr.mxu0 0.0
        %v480 = vand.u32 %v372, 4294901760
        %v481 = vsub.f32 %v372, %v480
        %v482 = vand.u32 %v481, 4294901760
        %v483 = vsub.f32 %v481, %v482
        %v484 = vand.u32 %v483, 4294901760
        %485 = vmatpush1.msra.mxu0 %v484
        %486 = vmatprep.subr.mxu0 0.0
        %v487 = vand.u32 %v373, 4294901760
        %v488 = vsub.f32 %v373, %v487
        %v489 = vand.u32 %v488, 4294901760
        %v490 = vsub.f32 %v488, %v489
        %v491 = vand.u32 %v490, 4294901760
        %492 = vmatpush1.msra.mxu0 %v491
        %493 = vmatprep.subr.mxu0 0.0
        %v494 = vand.u32 %v374, 4294901760
        %v495 = vsub.f32 %v374, %v494
        %v496 = vand.u32 %v495, 4294901760
        %v497 = vsub.f32 %v495, %v496
        %v498 = vand.u32 %v497, 4294901760
        %499 = vmatpush1.msra.mxu0 %v498
        %500 = vmatprep.subr.mxu0 0.0
        %v501 = vand.u32 %v375, 4294901760
        %v502 = vsub.f32 %v375, %v501
        %v503 = vand.u32 %v502, 4294901760
        %v504 = vsub.f32 %v502, %v503
        %v505 = vand.u32 %v504, 4294901760
        %506 = vmatpush1.msra.mxu0 %v505
        %507 = vmatprep.subr.mxu0 0.0
        %v508 = vand.u32 %v376, 4294901760
        %v509 = vsub.f32 %v376, %v508
        %v510 = vand.u32 %v509, 4294901760
        %v511 = vsub.f32 %v509, %v510
        %v512 = vand.u32 %v511, 4294901760
        %513 = vmatpush1.msra.mxu0 %v512
        %514 = vmatprep.subr.mxu0 0.0
        %v515 = vand.u32 %v377, 4294901760
        %v516 = vsub.f32 %v377, %v515
        %v517 = vand.u32 %v516, 4294901760
        %v518 = vsub.f32 %v516, %v517
        %v519 = vand.u32 %v518, 4294901760
        %520 = vmatpush1.msra.mxu0 %v519
        %521 = vmatprep.subr.mxu0 0.0
        %v522 = vand.u32 %v378, 4294901760
        %v523 = vsub.f32 %v378, %v522
        %v524 = vand.u32 %v523, 4294901760
        %v525 = vsub.f32 %v523, %v524
        %v526 = vand.u32 %v525, 4294901760
        %527 = vmatpush1.msra.mxu0 %v526
        %528 = vmatprep.subr.mxu0 0.0
        %v529 = vand.u32 %v379, 4294901760
        %v530 = vsub.f32 %v379, %v529
        %v531 = vand.u32 %v530, 4294901760
        %v532 = vsub.f32 %v530, %v531
        %v533 = vand.u32 %v532, 4294901760
        %534 = vmatpush1.msra.mxu0 %v533
        %535 = vmatprep.subr.mxu0 0.0
        %v536 = vand.u32 %v380, 4294901760
        %v537 = vsub.f32 %v380, %v536
        %v538 = vand.u32 %v537, 4294901760
        %v539 = vsub.f32 %v537, %v538
        %v540 = vand.u32 %v539, 4294901760
        %541 = vmatpush1.msra.mxu0 %v540
        %542 = vmatprep.subr.mxu0 0.0
        %v543 = vand.u32 %v381, 4294901760
        %v544 = vsub.f32 %v381, %v543
        %v545 = vand.u32 %v544, 4294901760
        %v546 = vsub.f32 %v544, %v545
        %v547 = vand.u32 %v546, 4294901760
        %548 = vmatpush1.msra.mxu0 %v547
        %549 = vmatprep.subr.mxu0 0.0
        %v550 = vand.u32 %v382, 4294901760
        %v551 = vsub.f32 %v382, %v550
        %v552 = vand.u32 %v551, 4294901760
        %v553 = vsub.f32 %v551, %v552
        %v554 = vand.u32 %v553, 4294901760
        %555 = vmatpush1.msra.mxu0 %v554
        %556 = vmatprep.subr.mxu0 0.0
        %v557 = vand.u32 %v383, 4294901760
        %v558 = vsub.f32 %v383, %v557
        %v559 = vand.u32 %v558, 4294901760
        %v560 = vsub.f32 %v558, %v559
        %v561 = vand.u32 %v560, 4294901760
        %562 = vmatpush1.msra.mxu0 %v561
        %563 = vmatprep.subr.mxu0 0.0
        %v564 = vand.u32 %v384, 4294901760
        %v565 = vsub.f32 %v384, %v564
        %v566 = vand.u32 %v565, 4294901760
        %v567 = vsub.f32 %v565, %v566
        %v568 = vand.u32 %v567, 4294901760
        %569 = vmatpush1.msra.mxu0 %v568
        %570 = vmatprep.subr.mxu0 0.0
        %v571 = vand.u32 %v385, 4294901760
        %v572 = vsub.f32 %v385, %v571
        %v573 = vand.u32 %v572, 4294901760
        %v574 = vsub.f32 %v572, %v573
        %v575 = vand.u32 %v574, 4294901760
        %576 = vmatpush1.msra.mxu0 %v575
        %577 = vmatprep.subr.mxu0 0.0
        %v578 = vand.u32 %v386, 4294901760
        %v579 = vsub.f32 %v386, %v578
        %v580 = vand.u32 %v579, 4294901760
        %v581 = vsub.f32 %v579, %v580
        %v582 = vand.u32 %v581, 4294901760
        %583 = vmatpush1.msra.mxu0 %v582
        %584 = vmatprep.subr.mxu0 0.0
        %v585 = vand.u32 %v387, 4294901760
        %v586 = vsub.f32 %v387, %v585
        %v587 = vand.u32 %v586, 4294901760
        %v588 = vsub.f32 %v586, %v587
        %v589 = vand.u32 %v588, 4294901760
        %590 = vmatpush1.msra.mxu0 %v589
        %591 = vmatprep.subr.mxu0 0.0
        %592 = vmatpush1.msra.mxu0 0.0
        %593 = vmatprep.subr.mxu0 0.0
        %594 = vmatpush1.msra.mxu0 0.0
        %595 = vmatprep.subr.mxu0 0.0
        %596 = vmatpush1.msra.mxu0 0.0
        %597 = vmatprep.subr.mxu0 0.0
        %598 = vmatpush1.msra.mxu0 0.0
        %599 = vmatprep.subr.mxu0 0.0
        %600 = vmatpush1.msra.mxu0 0.0
        %601 = vmatprep.subr.mxu0 0.0
        %602 = vmatpush1.msra.mxu0 0.0
        %603 = vmatprep.subr.mxu0 0.0
        %604 = vmatpush1.msra.mxu0 0.0
        %605 = vmatprep.subr.mxu0 0.0
        %606 = vmatpush1.msra.mxu0 0.0
        %607 = vmatprep.subr.mxu0 0.0
        %608 = vmatpush1.msra.mxu0 0.0
        %609 = vmatprep.subr.mxu0 0.0
        %610 = vmatpush1.msra.mxu0 0.0
        %611 = vmatprep.subr.mxu0 0.0
        %612 = vmatpush1.msra.mxu0 0.0
        %613 = vmatprep.subr.mxu0 0.0
        %614 = vmatpush1.msra.mxu0 0.0
        %615 = vmatprep.subr.mxu0 0.0
        %616 = vmatpush1.msra.mxu0 0.0
        %617 = vmatprep.subr.mxu0 0.0
        %618 = vmatpush1.msra.mxu0 0.0
        %619 = vmatprep.subr.mxu0 0.0
        %620 = vmatpush1.msra.mxu0 0.0
        %621 = vmatprep.subr.mxu0 0.0
        %622 = vmatpush1.msra.mxu0 0.0
        %623 = vmatprep.mubr.f32.mxu0 0.0
        %v624 = vand.u32 %v371, 4294901760
        %625 = vmatmul.mubr.f32.gmra.mrb[0].mxu0 %v624
        %v626 = vpop.f32.mrb[0].mxu0
        %v627 = vadd.f32 %v476, %v626
        %v628 = vpop.f32.mrb[0].mxu0
        %629 = vdwg.mxu0
        %630 = vmatprep.subr.mxu0 0.0
        %v631 = vand.u32 %v372, 4294901760
        %v632 = vsub.f32 %v372, %v631
        %633 = vmatpush1.msra.mxu0 %v632
        %634 = vmatprep.subr.mxu0 0.0
        %v635 = vand.u32 %v373, 4294901760
        %v636 = vsub.f32 %v373, %v635
        %637 = vmatpush1.msra.mxu0 %v636
        %638 = vmatprep.subr.mxu0 0.0
        %v639 = vand.u32 %v374, 4294901760
        %v640 = vsub.f32 %v374, %v639
        %641 = vmatpush1.msra.mxu0 %v640
        %642 = vmatprep.subr.mxu0 0.0
        %v643 = vand.u32 %v375, 4294901760
        %v644 = vsub.f32 %v375, %v643
        %645 = vmatpush1.msra.mxu0 %v644
        %646 = vmatprep.subr.mxu0 0.0
        %v647 = vand.u32 %v376, 4294901760
        %v648 = vsub.f32 %v376, %v647
        %649 = vmatpush1.msra.mxu0 %v648
        %650 = vmatprep.subr.mxu0 0.0
        %v651 = vand.u32 %v377, 4294901760
        %v652 = vsub.f32 %v377, %v651
        %653 = vmatpush1.msra.mxu0 %v652
        %654 = vmatprep.subr.mxu0 0.0
        %v655 = vand.u32 %v378, 4294901760
        %v656 = vsub.f32 %v378, %v655
        %657 = vmatpush1.msra.mxu0 %v656
        %658 = vmatprep.subr.mxu0 0.0
        %v659 = vand.u32 %v379, 4294901760
        %v660 = vsub.f32 %v379, %v659
        %661 = vmatpush1.msra.mxu0 %v660
        %662 = vmatprep.subr.mxu0 0.0
        %v663 = vand.u32 %v380, 4294901760
        %v664 = vsub.f32 %v380, %v663
        %665 = vmatpush1.msra.mxu0 %v664
        %666 = vmatprep.subr.mxu0 0.0
        %v667 = vand.u32 %v381, 4294901760
        %v668 = vsub.f32 %v381, %v667
        %669 = vmatpush1.msra.mxu0 %v668
        %670 = vmatprep.subr.mxu0 0.0
        %v671 = vand.u32 %v382, 4294901760
        %v672 = vsub.f32 %v382, %v671
        %673 = vmatpush1.msra.mxu0 %v672
        %674 = vmatprep.subr.mxu0 0.0
        %v675 = vand.u32 %v383, 4294901760
        %v676 = vsub.f32 %v383, %v675
        %677 = vmatpush1.msra.mxu0 %v676
        %678 = vmatprep.subr.mxu0 0.0
        %v679 = vand.u32 %v384, 4294901760
        %v680 = vsub.f32 %v384, %v679
        %681 = vmatpush1.msra.mxu0 %v680
        %682 = vmatprep.subr.mxu0 0.0
        %v683 = vand.u32 %v385, 4294901760
        %v684 = vsub.f32 %v385, %v683
        %685 = vmatpush1.msra.mxu0 %v684
        %686 = vmatprep.subr.mxu0 0.0
        %v687 = vand.u32 %v386, 4294901760
        %v688 = vsub.f32 %v386, %v687
        %689 = vmatpush1.msra.mxu0 %v688
        %690 = vmatprep.subr.mxu0 0.0
        %v691 = vand.u32 %v387, 4294901760
        %v692 = vsub.f32 %v387, %v691
        %693 = vmatpush1.msra.mxu0 %v692
        %694 = vmatprep.subr.mxu0 0.0
        %695 = vmatpush1.msra.mxu0 0.0
        %696 = vmatprep.subr.mxu0 0.0
        %697 = vmatpush1.msra.mxu0 0.0
        %698 = vmatprep.subr.mxu0 0.0
        %699 = vmatpush1.msra.mxu0 0.0
        %700 = vmatprep.subr.mxu0 0.0
        %701 = vmatpush1.msra.mxu0 0.0
        %702 = vmatprep.subr.mxu0 0.0
        %703 = vmatpush1.msra.mxu0 0.0
        %704 = vmatprep.subr.mxu0 0.0
        %705 = vmatpush1.msra.mxu0 0.0
        %706 = vmatprep.subr.mxu0 0.0
        %707 = vmatpush1.msra.mxu0 0.0
        %708 = vmatprep.subr.mxu0 0.0
        %709 = vmatpush1.msra.mxu0 0.0
        %710 = vmatprep.subr.mxu0 0.0
        %711 = vmatpush1.msra.mxu0 0.0
        %712 = vmatprep.subr.mxu0 0.0
        %713 = vmatpush1.msra.mxu0 0.0
        %714 = vmatprep.subr.mxu0 0.0
        %715 = vmatpush1.msra.mxu0 0.0
        %716 = vmatprep.subr.mxu0 0.0
        %717 = vmatpush1.msra.mxu0 0.0
        %718 = vmatprep.subr.mxu0 0.0
        %719 = vmatpush1.msra.mxu0 0.0
        %720 = vmatprep.subr.mxu0 0.0
        %721 = vmatpush1.msra.mxu0 0.0
        %722 = vmatprep.subr.mxu0 0.0
        %723 = vmatpush1.msra.mxu0 0.0
        %724 = vmatprep.subr.mxu0 0.0
        %725 = vmatpush1.msra.mxu0 0.0
        %726 = vmatprep.mubr.f32.mxu0 0.0
        %v727 = vand.u32 %v371, 4294901760
        %v728 = vsub.f32 %v371, %v727
        %729 = vmatmul.mubr.f32.gmra.mrb[0].mxu0 %v728
        %v730 = vpop.f32.mrb[0].mxu0
        %v731 = vadd.f32 %v627, %v730
        %v732 = vpop.f32.mrb[0].mxu0
        %733 = vdwg.mxu0
        %734 = vmatprep.subr.mxu0 0.0
        %v735 = vand.u32 %v372, 4294901760
        %736 = vmatpush1.msra.mxu0 %v735
        %737 = vmatprep.subr.mxu0 0.0
        %v738 = vand.u32 %v373, 4294901760
        %739 = vmatpush1.msra.mxu0 %v738
        %740 = vmatprep.subr.mxu0 0.0
        %v741 = vand.u32 %v374, 4294901760
        %742 = vmatpush1.msra.mxu0 %v741
        %743 = vmatprep.subr.mxu0 0.0
        %v744 = vand.u32 %v375, 4294901760
        %745 = vmatpush1.msra.mxu0 %v744
        %746 = vmatprep.subr.mxu0 0.0
        %v747 = vand.u32 %v376, 4294901760
        %748 = vmatpush1.msra.mxu0 %v747
        %749 = vmatprep.subr.mxu0 0.0
        %v750 = vand.u32 %v377, 4294901760
        %751 = vmatpush1.msra.mxu0 %v750
        %752 = vmatprep.subr.mxu0 0.0
        %v753 = vand.u32 %v378, 4294901760
        %754 = vmatpush1.msra.mxu0 %v753
        %755 = vmatprep.subr.mxu0 0.0
        %v756 = vand.u32 %v379, 4294901760
        %757 = vmatpush1.msra.mxu0 %v756
        %758 = vmatprep.subr.mxu0 0.0
        %v759 = vand.u32 %v380, 4294901760
        %760 = vmatpush1.msra.mxu0 %v759
        %761 = vmatprep.subr.mxu0 0.0
        %v762 = vand.u32 %v381, 4294901760
        %763 = vmatpush1.msra.mxu0 %v762
        %764 = vmatprep.subr.mxu0 0.0
        %v765 = vand.u32 %v382, 4294901760
        %766 = vmatpush1.msra.mxu0 %v765
        %767 = vmatprep.subr.mxu0 0.0
        %v768 = vand.u32 %v383, 4294901760
        %769 = vmatpush1.msra.mxu0 %v768
        %770 = vmatprep.subr.mxu0 0.0
        %v771 = vand.u32 %v384, 4294901760
        %772 = vmatpush1.msra.mxu0 %v771
        %773 = vmatprep.subr.mxu0 0.0
        %v774 = vand.u32 %v385, 4294901760
        %775 = vmatpush1.msra.mxu0 %v774
        %776 = vmatprep.subr.mxu0 0.0
        %v777 = vand.u32 %v386, 4294901760
        %778 = vmatpush1.msra.mxu0 %v777
        %779 = vmatprep.subr.mxu0 0.0
        %v780 = vand.u32 %v387, 4294901760
        %781 = vmatpush1.msra.mxu0 %v780
        %782 = vmatprep.subr.mxu0 0.0
        %783 = vmatpush1.msra.mxu0 0.0
        %784 = vmatprep.subr.mxu0 0.0
        %785 = vmatpush1.msra.mxu0 0.0
        %786 = vmatprep.subr.mxu0 0.0
        %787 = vmatpush1.msra.mxu0 0.0
        %788 = vmatprep.subr.mxu0 0.0
        %789 = vmatpush1.msra.mxu0 0.0
        %790 = vmatprep.subr.mxu0 0.0
        %791 = vmatpush1.msra.mxu0 0.0
        %792 = vmatprep.subr.mxu0 0.0
        %793 = vmatpush1.msra.mxu0 0.0
        %794 = vmatprep.subr.mxu0 0.0
        %795 = vmatpush1.msra.mxu0 0.0
        %796 = vmatprep.subr.mxu0 0.0
        %797 = vmatpush1.msra.mxu0 0.0
        %798 = vmatprep.subr.mxu0 0.0
        %799 = vmatpush1.msra.mxu0 0.0
        %800 = vmatprep.subr.mxu0 0.0
        %801 = vmatpush1.msra.mxu0 0.0
        %802 = vmatprep.subr.mxu0 0.0
        %803 = vmatpush1.msra.mxu0 0.0
        %804 = vmatprep.subr.mxu0 0.0
        %805 = vmatpush1.msra.mxu0 0.0
        %806 = vmatprep.subr.mxu0 0.0
        %807 = vmatpush1.msra.mxu0 0.0
        %808 = vmatprep.subr.mxu0 0.0
        %809 = vmatpush1.msra.mxu0 0.0
        %810 = vmatprep.subr.mxu0 0.0
        %811 = vmatpush1.msra.mxu0 0.0
        %812 = vmatprep.subr.mxu0 0.0
        %813 = vmatpush1.msra.mxu0 0.0
        %814 = vmatprep.mubr.f32.mxu0 0.0
        %v815 = vand.u32 %v371, 4294901760
        %v816 = vsub.f32 %v371, %v815
        %v817 = vand.u32 %v816, 4294901760
        %818 = vmatmul.mubr.f32.gmra.mrb[0].mxu0 %v817
        %v819 = vpop.f32.mrb[0].mxu0
        %v820 = vadd.f32 %v731, %v819
        %v821 = vpop.f32.mrb[0].mxu0
        %822 = vdwg.mxu0
        %823 = vmatprep.subr.mxu0 0.0
        %v824 = vand.u32 %v372, 4294901760
        %v825 = vsub.f32 %v372, %v824
        %v826 = vand.u32 %v825, 4294901760
        %827 = vmatpush1.msra.mxu0 %v826
        %828 = vmatprep.subr.mxu0 0.0
        %v829 = vand.u32 %v373, 4294901760
        %v830 = vsub.f32 %v373, %v829
        %v831 = vand.u32 %v830, 4294901760
        %832 = vmatpush1.msra.mxu0 %v831
        %833 = vmatprep.subr.mxu0 0.0
        %v834 = vand.u32 %v374, 4294901760
        %v835 = vsub.f32 %v374, %v834
        %v836 = vand.u32 %v835, 4294901760
        %837 = vmatpush1.msra.mxu0 %v836
        %838 = vmatprep.subr.mxu0 0.0
        %v839 = vand.u32 %v375, 4294901760
        %v840 = vsub.f32 %v375, %v839
        %v841 = vand.u32 %v840, 4294901760
        %842 = vmatpush1.msra.mxu0 %v841
        %843 = vmatprep.subr.mxu0 0.0
        %v844 = vand.u32 %v376, 4294901760
        %v845 = vsub.f32 %v376, %v844
        %v846 = vand.u32 %v845, 4294901760
        %847 = vmatpush1.msra.mxu0 %v846
        %848 = vmatprep.subr.mxu0 0.0
        %v849 = vand.u32 %v377, 4294901760
        %v850 = vsub.f32 %v377, %v849
        %v851 = vand.u32 %v850, 4294901760
        %852 = vmatpush1.msra.mxu0 %v851
        %853 = vmatprep.subr.mxu0 0.0
        %v854 = vand.u32 %v378, 4294901760
        %v855 = vsub.f32 %v378, %v854
        %v856 = vand.u32 %v855, 4294901760
        %857 = vmatpush1.msra.mxu0 %v856
        %858 = vmatprep.subr.mxu0 0.0
        %v859 = vand.u32 %v379, 4294901760
        %v860 = vsub.f32 %v379, %v859
        %v861 = vand.u32 %v860, 4294901760
        %862 = vmatpush1.msra.mxu0 %v861
        %863 = vmatprep.subr.mxu0 0.0
        %v864 = vand.u32 %v380, 4294901760
        %v865 = vsub.f32 %v380, %v864
        %v866 = vand.u32 %v865, 4294901760
        %867 = vmatpush1.msra.mxu0 %v866
        %868 = vmatprep.subr.mxu0 0.0
        %v869 = vand.u32 %v381, 4294901760
        %v870 = vsub.f32 %v381, %v869
        %v871 = vand.u32 %v870, 4294901760
        %872 = vmatpush1.msra.mxu0 %v871
        %873 = vmatprep.subr.mxu0 0.0
        %v874 = vand.u32 %v382, 4294901760
        %v875 = vsub.f32 %v382, %v874
        %v876 = vand.u32 %v875, 4294901760
        %877 = vmatpush1.msra.mxu0 %v876
        %878 = vmatprep.subr.mxu0 0.0
        %v879 = vand.u32 %v383, 4294901760
        %v880 = vsub.f32 %v383, %v879
        %v881 = vand.u32 %v880, 4294901760
        %882 = vmatpush1.msra.mxu0 %v881
        %883 = vmatprep.subr.mxu0 0.0
        %v884 = vand.u32 %v384, 4294901760
        %v885 = vsub.f32 %v384, %v884
        %v886 = vand.u32 %v885, 4294901760
        %887 = vmatpush1.msra.mxu0 %v886
        %888 = vmatprep.subr.mxu0 0.0
        %v889 = vand.u32 %v385, 4294901760
        %v890 = vsub.f32 %v385, %v889
        %v891 = vand.u32 %v890, 4294901760
        %892 = vmatpush1.msra.mxu0 %v891
        %893 = vmatprep.subr.mxu0 0.0
        %v894 = vand.u32 %v386, 4294901760
        %v895 = vsub.f32 %v386, %v894
        %v896 = vand.u32 %v895, 4294901760
        %897 = vmatpush1.msra.mxu0 %v896
        %898 = vmatprep.subr.mxu0 0.0
        %v899 = vand.u32 %v387, 4294901760
        %v900 = vsub.f32 %v387, %v899
        %v901 = vand.u32 %v900, 4294901760
        %902 = vmatpush1.msra.mxu0 %v901
        %903 = vmatprep.subr.mxu0 0.0
        %904 = vmatpush1.msra.mxu0 0.0
        %905 = vmatprep.subr.mxu0 0.0
        %906 = vmatpush1.msra.mxu0 0.0
        %907 = vmatprep.subr.mxu0 0.0
        %908 = vmatpush1.msra.mxu0 0.0
        %909 = vmatprep.subr.mxu0 0.0
        %910 = vmatpush1.msra.mxu0 0.0
        %911 = vmatprep.subr.mxu0 0.0
        %912 = vmatpush1.msra.mxu0 0.0
        %913 = vmatprep.subr.mxu0 0.0
        %914 = vmatpush1.msra.mxu0 0.0
        %915 = vmatprep.subr.mxu0 0.0
        %916 = vmatpush1.msra.mxu0 0.0
        %917 = vmatprep.subr.mxu0 0.0
        %918 = vmatpush1.msra.mxu0 0.0
        %919 = vmatprep.subr.mxu0 0.0
        %920 = vmatpush1.msra.mxu0 0.0
        %921 = vmatprep.subr.mxu0 0.0
        %922 = vmatpush1.msra.mxu0 0.0
        %923 = vmatprep.subr.mxu0 0.0
        %924 = vmatpush1.msra.mxu0 0.0
        %925 = vmatprep.subr.mxu0 0.0
        %926 = vmatpush1.msra.mxu0 0.0
        %927 = vmatprep.subr.mxu0 0.0
        %928 = vmatpush1.msra.mxu0 0.0
        %929 = vmatprep.subr.mxu0 0.0
        %930 = vmatpush1.msra.mxu0 0.0
        %931 = vmatprep.subr.mxu0 0.0
        %932 = vmatpush1.msra.mxu0 0.0
        %933 = vmatprep.subr.mxu0 0.0
        %934 = vmatpush1.msra.mxu0 0.0
        %935 = vmatprep.mubr.f32.mxu0 0.0
        %v936 = vand.u32 %v371, 4294901760
        %937 = vmatmul.mubr.f32.gmra.mrb[0].mxu0 %v936
        %v938 = vpop.f32.mrb[0].mxu0
        %v939 = vadd.f32 %v820, %v938
        %v940 = vpop.f32.mrb[0].mxu0
        %941 = vdwg.mxu0
        %942 = vmatprep.subr.mxu0 0.0
        %v943 = vand.u32 %v372, 4294901760
        %944 = vmatpush1.msra.mxu0 %v943
        %945 = vmatprep.subr.mxu0 0.0
        %v946 = vand.u32 %v373, 4294901760
        %947 = vmatpush1.msra.mxu0 %v946
        %948 = vmatprep.subr.mxu0 0.0
        %v949 = vand.u32 %v374, 4294901760
        %950 = vmatpush1.msra.mxu0 %v949
        %951 = vmatprep.subr.mxu0 0.0
        %v952 = vand.u32 %v375, 4294901760
        %953 = vmatpush1.msra.mxu0 %v952
        %954 = vmatprep.subr.mxu0 0.0
        %v955 = vand.u32 %v376, 4294901760
        %956 = vmatpush1.msra.mxu0 %v955
        %957 = vmatprep.subr.mxu0 0.0
        %v958 = vand.u32 %v377, 4294901760
        %959 = vmatpush1.msra.mxu0 %v958
        %960 = vmatprep.subr.mxu0 0.0
        %v961 = vand.u32 %v378, 4294901760
        %962 = vmatpush1.msra.mxu0 %v961
        %963 = vmatprep.subr.mxu0 0.0
        %v964 = vand.u32 %v379, 4294901760
        %965 = vmatpush1.msra.mxu0 %v964
        %966 = vmatprep.subr.mxu0 0.0
        %v967 = vand.u32 %v380, 4294901760
        %968 = vmatpush1.msra.mxu0 %v967
        %969 = vmatprep.subr.mxu0 0.0
        %v970 = vand.u32 %v381, 4294901760
        %971 = vmatpush1.msra.mxu0 %v970
        %972 = vmatprep.subr.mxu0 0.0
        %v973 = vand.u32 %v382, 4294901760
        %974 = vmatpush1.msra.mxu0 %v973
        %975 = vmatprep.subr.mxu0 0.0
        %v976 = vand.u32 %v383, 4294901760
        %977 = vmatpush1.msra.mxu0 %v976
        %978 = vmatprep.subr.mxu0 0.0
        %v979 = vand.u32 %v384, 4294901760
        %980 = vmatpush1.msra.mxu0 %v979
        %981 = vmatprep.subr.mxu0 0.0
        %v982 = vand.u32 %v385, 4294901760
        %983 = vmatpush1.msra.mxu0 %v982
        %984 = vmatprep.subr.mxu0 0.0
        %v985 = vand.u32 %v386, 4294901760
        %986 = vmatpush1.msra.mxu0 %v985
        %987 = vmatprep.subr.mxu0 0.0
        %v988 = vand.u32 %v387, 4294901760
        %989 = vmatpush1.msra.mxu0 %v988
        %990 = vmatprep.subr.mxu0 0.0
        %991 = vmatpush1.msra.mxu0 0.0
        %992 = vmatprep.subr.mxu0 0.0
        %993 = vmatpush1.msra.mxu0 0.0
        %994 = vmatprep.subr.mxu0 0.0
        %995 = vmatpush1.msra.mxu0 0.0
        %996 = vmatprep.subr.mxu0 0.0
        %997 = vmatpush1.msra.mxu0 0.0
        %998 = vmatprep.subr.mxu0 0.0
        %999 = vmatpush1.msra.mxu0 0.0
        %1000 = vmatprep.subr.mxu0 0.0
        %1001 = vmatpush1.msra.mxu0 0.0
        %1002 = vmatprep.subr.mxu0 0.0
        %1003 = vmatpush1.msra.mxu0 0.0
        %1004 = vmatprep.subr.mxu0 0.0
        %1005 = vmatpush1.msra.mxu0 0.0
        %1006 = vmatprep.subr.mxu0 0.0
        %1007 = vmatpush1.msra.mxu0 0.0
        %1008 = vmatprep.subr.mxu0 0.0
        %1009 = vmatpush1.msra.mxu0 0.0
        %1010 = vmatprep.subr.mxu0 0.0
        %1011 = vmatpush1.msra.mxu0 0.0
        %1012 = vmatprep.subr.mxu0 0.0
        %1013 = vmatpush1.msra.mxu0 0.0
        %1014 = vmatprep.subr.mxu0 0.0
        %1015 = vmatpush1.msra.mxu0 0.0
        %1016 = vmatprep.subr.mxu0 0.0
        %1017 = vmatpush1.msra.mxu0 0.0
        %1018 = vmatprep.subr.mxu0 0.0
        %1019 = vmatpush1.msra.mxu0 0.0
        %1020 = vmatprep.subr.mxu0 0.0
        %1021 = vmatpush1.msra.mxu0 0.0
        %1022 = vmatprep.mubr.f32.mxu0 0.0
        %v1023 = vand.u32 %v371, 4294901760
        %1024 = vmatmul.mubr.f32.gmra.mrb[0].mxu0 %v1023
        %v1025 = vpop.f32.mrb[0].mxu0
        %v1026 = vadd.f32 %v939, %v1025
        %v1027 = vpop.f32.mrb[0].mxu0
        %1028 = vdwg.mxu0
        %v1029 = vmul.f32 %v1026, %v1026
        %v1031 = vrot.slane %v1029, 7
        %v1033 = vsub.f32 %v1026, %v1031
        %v1034 = vmax.f32 %v1033, 0.0
        %v1035 = vadd.f32 %v1034, 1e-05
        %v1036 = vrsqrt.pop %v1035
        %v1037 = vld [vmem:[%s1] sm:$0x1]
        %v1039 = vlaneseq
        %v1040 = vshrl.u32 %v1039, 7
        %v1041 = vsub.s32 0, %v1040
        %v1042 = vrot.slane %v1037, %v1041
        %v1044 = vmul.f32 %v1036, %v1042
        %v1045 = vld [vmem:[%s2] sm:$0x1]
        %v1047 = vrot.slane %v1044, 1
        %v1049 = vmul.f32 %v1026, %v1047
        %v1050 = vsub.f32 %v1045, %v1049
        %v1051 = vld [vmem:[%s202] sm:$0xff]
        %v1052 = vld [vmem:[%s202 + $0x8] sm:$0xff]
        %v1053 = vld [vmem:[%s202 + $0x10] sm:$0xff]
        %v1054 = vld [vmem:[%s202 + $0x18] sm:$0xff]
        %v1055 = vld [vmem:[%s202 + $0x20] sm:$0xff]
        %v1056 = vld [vmem:[%s202 + $0x28] sm:$0xff]
        %v1057 = vld [vmem:[%s202 + $0x30] sm:$0xff]
        %v1058 = vld [vmem:[%s202 + $0x38] sm:$0xff]
        %v1059 = vld [vmem:[%s202 + $0x40] sm:$0xff]
        %v1060 = vld [vmem:[%s202 + $0x48] sm:$0xff]
        %v1061 = vld [vmem:[%s202 + $0x50] sm:$0xff]
        %v1062 = vld [vmem:[%s202 + $0x58] sm:$0xff]
        %v1063 = vld [vmem:[%s202 + $0x60] sm:$0xff]
        %v1064 = vld [vmem:[%s202 + $0x68] sm:$0xff]
        %v1065 = vld [vmem:[%s202 + $0x70] sm:$0xff]
        %v1066 = vld [vmem:[%s202 + $0x78] sm:$0xff]
        %v1067 = vld [vmem:[%s202 + $0x80] sm:$0xff]
        %v1068 = vld [vmem:[%s202 + $0x88] sm:$0xff]
        %v1069 = vld [vmem:[%s202 + $0x90] sm:$0xff]
        %v1070 = vld [vmem:[%s202 + $0x98] sm:$0xff]
        %v1071 = vld [vmem:[%s202 + $0xa0] sm:$0xff]
        %v1072 = vld [vmem:[%s202 + $0xa8] sm:$0xff]
        %v1073 = vld [vmem:[%s202 + $0xb0] sm:$0xff]
        %v1074 = vld [vmem:[%s202 + $0xb8] sm:$0xff]
        %v1075 = vld [vmem:[%s202 + $0xc0] sm:$0xff]
        %v1076 = vld [vmem:[%s202 + $0xc8] sm:$0xff]
        %v1077 = vld [vmem:[%s202 + $0xd0] sm:$0xff]
        %v1078 = vld [vmem:[%s202 + $0xd8] sm:$0xff]
        %v1079 = vld [vmem:[%s202 + $0xe0] sm:$0xff]
        %v1080 = vld [vmem:[%s202 + $0xe8] sm:$0xff]
        %v1081 = vld [vmem:[%s202 + $0xf0] sm:$0xff]
        %v1082 = vld [vmem:[%s202 + $0xf8] sm:$0xff]
        %v1083 = vlaneseq
        %v1084 = vshrl.u32 %v1083, 7
        %v1085 = vsub.s32 1, %v1084
        %v1086 = vrot.slane %v1044, %v1085
        %v1087 = vmul.f32 %v1051, %v1086
        %v1088 = vmul.f32 %v1052, %v1086
        %v1089 = vmul.f32 %v1053, %v1086
        %v1090 = vmul.f32 %v1054, %v1086
        %v1091 = vmul.f32 %v1055, %v1086
        %v1092 = vmul.f32 %v1056, %v1086
        %v1093 = vmul.f32 %v1057, %v1086
        %v1094 = vmul.f32 %v1058, %v1086
        %v1095 = vmul.f32 %v1059, %v1086
        %v1096 = vmul.f32 %v1060, %v1086
        %v1097 = vmul.f32 %v1061, %v1086
        %v1098 = vmul.f32 %v1062, %v1086
        %v1099 = vmul.f32 %v1063, %v1086
        %v1100 = vmul.f32 %v1064, %v1086
        %v1101 = vmul.f32 %v1065, %v1086
        %v1102 = vmul.f32 %v1066, %v1086
        %v1103 = vmul.f32 %v1067, %v1086
        %v1104 = vmul.f32 %v1068, %v1086
        %v1105 = vmul.f32 %v1069, %v1086
        %v1106 = vmul.f32 %v1070, %v1086
        %v1107 = vmul.f32 %v1071, %v1086
        %v1108 = vmul.f32 %v1072, %v1086
        %v1109 = vmul.f32 %v1073, %v1086
        %v1110 = vmul.f32 %v1074, %v1086
        %v1111 = vmul.f32 %v1075, %v1086
        %v1112 = vmul.f32 %v1076, %v1086
        %v1113 = vmul.f32 %v1077, %v1086
        %v1114 = vmul.f32 %v1078, %v1086
        %v1115 = vmul.f32 %v1079, %v1086
        %v1116 = vmul.f32 %v1080, %v1086
        %v1117 = vmul.f32 %v1081, %v1086
        %v1118 = vmul.f32 %v1082, %v1086
        %v1120 = vlaneseq
        %v1121 = vshrl.u32 %v1120, 7
        %v1122 = vsub.s32 0, %v1121
        %v1123 = vrot.slane %v1050, %v1122
        %v1125 = vadd.f32 %v1087, %v1123
        %v1126 = vadd.f32 %v1088, %v1123
        %v1127 = vadd.f32 %v1089, %v1123
        %v1128 = vadd.f32 %v1090, %v1123
        %v1129 = vadd.f32 %v1091, %v1123
        %v1130 = vadd.f32 %v1092, %v1123
        %v1131 = vadd.f32 %v1093, %v1123
        %v1132 = vadd.f32 %v1094, %v1123
        %v1133 = vadd.f32 %v1095, %v1123
        %v1134 = vadd.f32 %v1096, %v1123
        %v1135 = vadd.f32 %v1097, %v1123
        %v1136 = vadd.f32 %v1098, %v1123
        %v1137 = vadd.f32 %v1099, %v1123
        %v1138 = vadd.f32 %v1100, %v1123
        %v1139 = vadd.f32 %v1101, %v1123
        %v1140 = vadd.f32 %v1102, %v1123
        %v1141 = vadd.f32 %v1103, %v1123
        %v1142 = vadd.f32 %v1104, %v1123
        %v1143 = vadd.f32 %v1105, %v1123
        %v1144 = vadd.f32 %v1106, %v1123
        %v1145 = vadd.f32 %v1107, %v1123
        %v1146 = vadd.f32 %v1108, %v1123
        %v1147 = vadd.f32 %v1109, %v1123
        %v1148 = vadd.f32 %v1110, %v1123
        %v1149 = vadd.f32 %v1111, %v1123
        %v1150 = vadd.f32 %v1112, %v1123
        %v1151 = vadd.f32 %v1113, %v1123
        %v1152 = vadd.f32 %v1114, %v1123
        %v1153 = vadd.f32 %v1115, %v1123
        %v1154 = vadd.f32 %v1116, %v1123
        %v1155 = vadd.f32 %v1117, %v1123
        %v1156 = vadd.f32 %v1118, %v1123
        %1157 = vst [vmem:[%s230] sm:$0xff] %v1125
        %1158 = vst [vmem:[%s230 + $0x8] sm:$0xff] %v1126
        %1159 = vst [vmem:[%s230 + $0x10] sm:$0xff] %v1127
        %1160 = vst [vmem:[%s230 + $0x18] sm:$0xff] %v1128
        %1161 = vst [vmem:[%s230 + $0x20] sm:$0xff] %v1129
        %1162 = vst [vmem:[%s230 + $0x28] sm:$0xff] %v1130
        %1163 = vst [vmem:[%s230 + $0x30] sm:$0xff] %v1131
        %1164 = vst [vmem:[%s230 + $0x38] sm:$0xff] %v1132
        %1165 = vst [vmem:[%s230 + $0x40] sm:$0xff] %v1133
        %1166 = vst [vmem:[%s230 + $0x48] sm:$0xff] %v1134
        %1167 = vst [vmem:[%s230 + $0x50] sm:$0xff] %v1135
        %1168 = vst [vmem:[%s230 + $0x58] sm:$0xff] %v1136
        %1169 = vst [vmem:[%s230 + $0x60] sm:$0xff] %v1137
        %1170 = vst [vmem:[%s230 + $0x68] sm:$0xff] %v1138
        %1171 = vst [vmem:[%s230 + $0x70] sm:$0xff] %v1139
        %1172 = vst [vmem:[%s230 + $0x78] sm:$0xff] %v1140
        %1173 = vst [vmem:[%s230 + $0x80] sm:$0xff] %v1141
        %1174 = vst [vmem:[%s230 + $0x88] sm:$0xff] %v1142
        %1175 = vst [vmem:[%s230 + $0x90] sm:$0xff] %v1143
        %1176 = vst [vmem:[%s230 + $0x98] sm:$0xff] %v1144
        %1177 = vst [vmem:[%s230 + $0xa0] sm:$0xff] %v1145
        %1178 = vst [vmem:[%s230 + $0xa8] sm:$0xff] %v1146
        %1179 = vst [vmem:[%s230 + $0xb0] sm:$0xff] %v1147
        %1180 = vst [vmem:[%s230 + $0xb8] sm:$0xff] %v1148
        %1181 = vst [vmem:[%s230 + $0xc0] sm:$0xff] %v1149
        %1182 = vst [vmem:[%s230 + $0xc8] sm:$0xff] %v1150
        %1183 = vst [vmem:[%s230 + $0xd0] sm:$0xff] %v1151
        %1184 = vst [vmem:[%s230 + $0xd8] sm:$0xff] %v1152
        %1185 = vst [vmem:[%s230 + $0xe0] sm:$0xff] %v1153
        %1186 = vst [vmem:[%s230 + $0xe8] sm:$0xff] %v1154
        %1187 = vst [vmem:[%s230 + $0xf0] sm:$0xff] %v1155
        %1188 = vst [vmem:[%s230 + $0xf8] sm:$0xff] %v1156
        %s1189 = sand.u32 %s119, 1
        %s1190 = scalar_lea.sflag [#allocation5], %s1189
        %s1191 = sand.u32 %s119, 1
        %s1192 = smul.addr %s1191, 256
        %s1193 = scalar_lea.vmem [#allocation8], %s1192
        // Predicated region
        $region45: #{tpu_custom_call.1} parent=35 // pred_check
          %p1194 = pneg %p129
        $region46: #{tpu_custom_call.1} parent=35 // pred_check_branch
          %1196 = sbr.rel (%p1194) target = $region48
        $region47: #{tpu_custom_call.1} parent=35 // pred_region
          %s1198 = ssub.s32 4096, 4096
          %1199 = vsyncadd %s1190, %s1198
          %s1200 = smul.addr %s22, 32
          %s1201 = smul.addr %s1200, 128
          %s1202 = scalar_lea.hbm %s4, %s1201
          %s1203 = sshll.u32 %s1193, 4
          %s1204 = int_to_ptr.vmem [resolvable:$true] %s1203
          %1209 = dma.vmem_to_hbm [thread:$0]  %s1204, 4096, %s1202, %s1190, 128, 128, 8
        $region48: #{tpu_custom_call.1} parent=35 // pred_fallthru
          _
      $region36: #{tpu_custom_call.1} parent=5 // pred_fallthru
        _
      %p1210 = scmp.le.s32.totalorder 2, %s17
      // Predicated region
      $region49: #{tpu_custom_call.1} parent=5 // pred_check
        %p1211 = pneg %p1210
      $region50: #{tpu_custom_call.1} parent=5 // pred_check_branch
        %1213 = sbr.rel (%p1211) target = $region52
      $region51: #{tpu_custom_call.1} parent=5 // pred_region
        %s1214 = ssub.s32 %s17, 2
        // Predicated region
        $region53: #{tpu_custom_call.1} parent=51 // pred_check
          %p1215 = pneg %p135
        $region54: #{tpu_custom_call.1} parent=51 // pred_check_branch
          %1217 = sbr.rel (%p1215) target = $region56
        $region55: #{tpu_custom_call.1} parent=51 // pred_region
          %s1218 = sand.u32 %s120, 1
          %s1219 = scalar_lea.sflag [#allocation5], %s1218
          %s1220 = sand.u32 %s120, 1
          %s1221 = smul.addr %s1220, 256
          %s1222 = scalar_lea.vmem [#allocation8], %s1221
          %1223 = dma.done %s1219, 4096
        $region56: #{tpu_custom_call.1} parent=51 // pred_fallthru
          _
      $region52: #{tpu_custom_call.1} parent=5 // pred_fallthru
        _
    $region6: #{tpu_custom_call.1} parent=1 // loop_footer
      %s21 = sadd.s32 1, %s17
    $region7: #{tpu_custom_call.1} parent=1 // loop_footer_branch
      %16 = sbr.rel target = $region3
    $region8: #{tpu_custom_call.1} parent=1 // loop_exit
      _
    %1224 = vsyncpa [#allocation4], 1
    %s1225 = scalar_lea.sflag [#allocation4], 1
    %1226 = vsyncpa %s1225, 1
    %1227 = vsyncpa [#allocation7], 1
    %1228 = vsyncpa [#allocation5], 1
    %s1229 = scalar_lea.sflag [#allocation5], 1
    %1230 = vsyncpa %s1229, 1

</llo_original>
